<compile_context>
chip_gen: v7x
topology: tpu7x:2x2x1
jax: 0.10.0
libtpu: 0.0.40
codegen_flags: <defaults>
</compile_context>

<pallas_src>
import functools

import jax
import jax.numpy as jnp
from jax.experimental import pallas as pl
from jax.experimental.pallas import tpu as pltpu


def _round_up(x, m):
    return (x + m - 1) // m * m


def _cdiv(a, b):
    return -(-a // b)


def _pick_tile(extent, target, granule):
    """Largest multiple of `granule` <= min(target, extent) that divides `extent`.

    `extent` must itself be a multiple of `granule`, so this always terminates
    (128 is the worst-case fallback) and guarantees zero extra padding beyond
    the 128-lane rounding.
    """
    t = max(granule, (min(target, extent) // granule) * granule)
    while extent % t:
        t -= granule
    return t


def _vmem_limit_bytes():
    # Generation-aware VMEM budget: ~3/4 of physical capacity
    # (96 MiB on v5e/v6e's 128 MiB VMEM, 48 MiB on v7x's 64 MiB VMEM).
    try:
        cap = int(pltpu.get_tpu_info().vmem_capacity_bytes)
        return cap * 3 // 4
    except Exception:
        return 48 * 1024 * 1024


def linear_kernel(x_ref, wt_ref, b_ref, o_ref, acc_ref):
    # x_ref: [tm, tk], wt_ref: [tk, tn] (W pre-transposed), b_ref: [1, tn],
    # o_ref: [tm, tn], acc_ref: f32 [tm, tn] scratch.  Grid axis 2 is the
    # K reduction; the output block index is invariant along it.
    k = pl.program_id(2)

    @pl.when(k == 0)
    def _():
        acc_ref[...] = jnp.zeros_like(acc_ref)

    # Straight MXU matmul with f32 accumulate; no in-kernel transpose.
    acc_ref[...] += jnp.dot(
        x_ref[...], wt_ref[...], preferred_element_type=jnp.float32
    )

    @pl.when(k == pl.num_programs(2) - 1)
    def _():
        # Bias added exactly once, in f32, in the epilogue.
        o_ref[...] = (acc_ref[...] + b_ref[...]).astype(o_ref.dtype)


def prepare_linear_params(weight, bias, *, tn_target=512, tk_target=1024):
    """One-time weight prep (hoist out of the per-call path).

    Transposes W to [In, Out] and zero-pads to lane-dense, tile-aligned
    [Kp, Np]; bias becomes f32 [1, Np].  Zero padding in K/N is exact for the
    matmul and is sliced away after the kernel.
    """
    Out, In = weight.shape
    assert bias.shape == (Out,)
    Np = _round_up(max(Out, 1), 128)
    Kp = _round_up(max(In, 1), 128)
    # Targets are 256-multiples, which keeps v6e/v7x's 2x256x256 MXU fully fed
    # whenever the padded extents allow it; 128 remains the hard granule.
    tn = _pick_tile(Np, tn_target, 128)
    tk = _pick_tile(Kp, tk_target, 128)
    wt_p = jnp.pad(weight.T, ((0, Kp - In), (0, Np - Out)))           # [Kp, Np]
    b_p = jnp.pad(bias, (0, Np - Out)).reshape(1, Np).astype(jnp.float32)
    return wt_p, b_p, dict(out_features=Out, tn=tn, tk=tk)


@functools.partial(
    jax.jit, static_argnames=("out_features", "tn", "tk", "tm_target")
)
def linear_forward(x, wt_p, b_p, *, out_features, tn, tk, tm_target=512):
    """out = x @ W^T + b with W pre-transposed/padded by prepare_linear_params."""
    B, In = x.shape
    Kp, Np = wt_p.shape
    assert Np % tn == 0 and Kp % tk == 0 and b_p.shape == (1, Np)
    assert In <= Kp and out_features <= Np

    # Sublane granularity: f32 packs 8 rows per vreg, bf16 packs 16.
    sub = 16 if x.dtype == jnp.bfloat16 else 8
    tm = min(tm_target, _round_up(B, sub))

    # Megacore: make sure the "parallel" output axes expose >= 2 independent
    # blocks when possible, so v7x's two TensorCores both get work.
    while _cdiv(B, tm) * (Np // tn) < 2 and tm > sub:
        new_tm = max(sub, _round_up(tm // 2, sub))
        if new_tm == tm:
            break
        tm = new_tm

    # K zero-padding is required for correctness (garbage K would corrupt every
    # output row).  No M padding: the M grid axis uses cdiv and the partial
    # last block's out-of-range rows simply never exist in the (B, Np) output.
    x_p = jnp.pad(x, ((0, 0), (0, Kp - In))) if Kp != In else x

    grid = (_cdiv(B, tm), Np // tn, Kp // tk)

    out_p = pl.pallas_call(
        linear_kernel,
        out_shape=jax.ShapeDtypeStruct((B, Np), x.dtype),
        grid_spec=pltpu.PrefetchScalarGridSpec(
            num_scalar_prefetch=0,
            grid=grid,
            in_specs=[
                pl.BlockSpec((tm, tk), lambda i, j, k: (i, k)),   # x tile
                pl.BlockSpec((tk, tn), lambda i, j, k: (k, j)),   # W^T tile
                pl.BlockSpec((1, tn), lambda i, j, k: (0, j)),    # bias tile
            ],
            out_specs=pl.BlockSpec((tm, tn), lambda i, j, k: (i, j)),
            scratch_shapes=[pltpu.VMEM((tm, tn), jnp.float32)],
        ),
        compiler_params=pltpu.CompilerParams(
            dimension_semantics=("parallel", "parallel", "arbitrary"),
            vmem_limit_bytes=_vmem_limit_bytes(),
        ),
    )(x_p, wt_p, b_p)

    return out_p[:, :out_features]


def linear_regression_forward(x, weight, bias, *, use_pallas=None):
    """Convenience single-call wrapper with a small-problem fast path.

    For problems that fit inside one (8,128) lane tile anyway, lane padding plus
    pallas_call overhead dwarfs the matmul and plain XLA wins, so we bypass the
    kernel below a FLOP threshold unless use_pallas=True forces it.
    """
    B, In = x.shape
    Out = weight.shape[0]
    if use_pallas is None:
        use_pallas = (B * In * Out) >= (128 * 128 * 128)
    if not use_pallas:
        return x @ weight.T + bias
    wt_p, b_p, meta = prepare_linear_params(weight, bias)
    return linear_forward(x, wt_p, b_p, **meta)


if __name__ == "__main__":
    key = jax.random.PRNGKey(0)

    # --- Demo shapes consistent with LinearRegression(inputSize, outputSize) ---
    batch, input_size, output_size = 8, 32, 16
    kx, kw, kb = jax.random.split(key, 3)

    # PyTorch nn.Linear default init: uniform(-1/sqrt(in), 1/sqrt(in)).
    bound = 1.0 / jnp.sqrt(jnp.float32(input_size))
    weight = jax.random.uniform(
        kw, (output_size, input_size), jnp.float32, minval=-bound, maxval=bound
    )
    bias = jax.random.uniform(
        kb, (output_size,), jnp.float32, minval=-bound, maxval=bound
    )
    x = jax.random.normal(kx, (batch, input_size), jnp.float32)

    # Force the Pallas path (small shapes would otherwise take the XLA fast path)
    # so the kernel is actually exercised; weights are prepared once, up front.
    wt_p, b_p, meta = prepare_linear_params(weight, bias)
    out = jax.block_until_ready(linear_forward(x, wt_p, b_p, **meta))
    ref = x @ weight.T + bias
    assert out.shape == ref.shape, "shape mismatch vs reference (small)"
    assert jnp.allclose(out, ref, atol=1e-5, rtol=1e-5), "mismatch vs reference (small)"

    # Fast-path coverage (auto-dispatch sends this tiny problem to plain XLA).
    out_fast = jax.block_until_ready(linear_regression_forward(x, weight, bias))
    assert jnp.allclose(out_fast, ref, atol=1e-5, rtol=1e-5), "fast path mismatch"

    # --- Medium shape: exercises partial M block, K/N tiling and megacore split.
    B2, In2, Out2 = 200, 384, 320
    k2x, k2w, k2b = jax.random.split(jax.random.PRNGKey(1), 3)
    bound2 = 1.0 / jnp.sqrt(jnp.float32(In2))
    w2 = jax.random.uniform(k2w, (Out2, In2), jnp.float32, minval=-bound2, maxval=bound2)
    b2 = jax.random.uniform(k2b, (Out2,), jnp.float32, minval=-bound2, maxval=bound2)
    x2 = jax.random.normal(k2x, (B2, In2), jnp.float32)

    wt2_p, b2_p, meta2 = prepare_linear_params(w2, b2)
    out2 = jax.block_until_ready(linear_forward(x2, wt2_p, b2_p, **meta2))
    ref2 = x2 @ w2.T + b2
    assert out2.shape == ref2.shape, "shape mismatch vs reference (medium)"
    assert jnp.allclose(out2, ref2, atol=2e-4, rtol=2e-4), "mismatch vs reference (medium)"

    print("KERNEL_OK")
</pallas_src>

<mosaic_0001>
module attributes {stable_mosaic.version = 11 : i64} {
  func.func @linear_kernel(%arg0: i32, %arg1: i32, %arg2: i32, %arg3: memref<8x128xf32, #tpu.memory_space<vmem>>, %arg4: memref<128x128xf32, #tpu.memory_space<vmem>>, %arg5: memref<1x128xf32, #tpu.memory_space<vmem>>, %arg6: memref<8x128xf32, #tpu.memory_space<vmem>>, %arg7: memref<8x128xf32, #tpu.memory_space<vmem>>) attributes {dimension_semantics = [#tpu.dimension_semantics<parallel>, #tpu.dimension_semantics<parallel>, #tpu.dimension_semantics<arbitrary>], iteration_bounds = array<i64: 1, 1, 1>, scalar_prefetch = 0 : i64, scratch_operands = 1 : i64, tpu.core_type = #tpu.core_type<tc>, window_params = [{transform_indices = @transform_0, window_bounds = array<i64: 8, 128>}, {transform_indices = @transform_1, window_bounds = array<i64: 128, 128>}, {transform_indices = @transform_2, window_bounds = array<i64: 1, 128>}, {transform_indices = @transform_3, window_bounds = array<i64: 8, 128>}]} {
    %c0_i32 = arith.constant 0 : i32
    %0 = arith.cmpi eq, %arg2, %c0_i32 : i32
    %1 = arith.extui %0 : i1 to i32
    %c0_i32_0 = arith.constant 0 : i32
    %2 = arith.cmpi ne, %1, %c0_i32_0 : i32
    scf.if %2 {
      %cst_10 = arith.constant 0.000000e+00 : f32
      %12 = vector.broadcast %cst_10 : f32 to vector<8x128xf32>
      %c0_11 = arith.constant 0 : index
      %c0_12 = arith.constant 0 : index
      %13 = vector.load %arg7[%c0_11, %c0_12] : memref<8x128xf32, #tpu.memory_space<vmem>>, vector<8x128xf32>
      tpu.vector_store %arg7[%c0_11, %c0_12], %12 {strides = array<i32>} : memref<8x128xf32, #tpu.memory_space<vmem>>, vector<8x128xf32>,
    } else {
    }
    %c0 = arith.constant 0 : index
    %c0_1 = arith.constant 0 : index
    %3 = vector.load %arg7[%c0, %c0_1] : memref<8x128xf32, #tpu.memory_space<vmem>>, vector<8x128xf32>
    %c0_2 = arith.constant 0 : index
    %c0_3 = arith.constant 0 : index
    %4 = vector.load %arg3[%c0_2, %c0_3] : memref<8x128xf32, #tpu.memory_space<vmem>>, vector<8x128xf32>
    %c0_4 = arith.constant 0 : index
    %c0_5 = arith.constant 0 : index
    %5 = vector.load %arg4[%c0_4, %c0_5] : memref<128x128xf32, #tpu.memory_space<vmem>>, vector<128x128xf32>
    %cst = arith.constant dense<0.000000e+00> : vector<8x128xf32>
    %6 = tpu.matmul %4, %5, %cst {dimension_numbers = #tpu.dot_dimension_numbers<[1], [0], [0], [1], [0, 0, 1, 1], [], []>} : vector<8x128xf32>, vector<128x128xf32>, vector<8x128xf32> -> vector<8x128xf32>
    %7 = arith.addf %3, %6 : vector<8x128xf32>
    %c0_6 = arith.constant 0 : index
    %c0_7 = arith.constant 0 : index
    %8 = vector.load %arg7[%c0_6, %c0_7] : memref<8x128xf32, #tpu.memory_space<vmem>>, vector<8x128xf32>
    tpu.vector_store %arg7[%c0_6, %c0_7], %7 {strides = array<i32>} : memref<8x128xf32, #tpu.memory_space<vmem>>, vector<8x128xf32>,
    %c0_i32_8 = arith.constant 0 : i32
    %9 = arith.cmpi eq, %arg2, %c0_i32_8 : i32
    %10 = arith.extui %9 : i1 to i32
    %c0_i32_9 = arith.constant 0 : i32
    %11 = arith.cmpi ne, %10, %c0_i32_9 : i32
    scf.if %11 {
      %c0_10 = arith.constant 0 : index
      %c0_11 = arith.constant 0 : index
      %12 = vector.load %arg7[%c0_10, %c0_11] : memref<8x128xf32, #tpu.memory_space<vmem>>, vector<8x128xf32>
      %c0_12 = arith.constant 0 : index
      %c0_13 = arith.constant 0 : index
      %13 = vector.load %arg5[%c0_12, %c0_13] : memref<1x128xf32, #tpu.memory_space<vmem>>, vector<1x128xf32>
      %14 = vector.broadcast %13 : vector<1x128xf32> to vector<8x128xf32>
      %15 = arith.addf %12, %14 : vector<8x128xf32>
      %c0_14 = arith.constant 0 : index
      %c0_15 = arith.constant 0 : index
      %16 = vector.load %arg6[%c0_14, %c0_15] : memref<8x128xf32, #tpu.memory_space<vmem>>, vector<8x128xf32>
      tpu.vector_store %arg6[%c0_14, %c0_15], %15 {strides = array<i32>} : memref<8x128xf32, #tpu.memory_space<vmem>>, vector<8x128xf32>,
    } else {
    }
    return
  }
  func.func @transform_0(%arg0: i32, %arg1: i32, %arg2: i32) -> (i32, i32) {
    %c0_i32 = arith.constant 0 : i32
    return %arg0, %arg2 : i32, i32
  }
  func.func @transform_1(%arg0: i32, %arg1: i32, %arg2: i32) -> (i32, i32) {
    %c0_i32 = arith.constant 0 : i32
    return %arg2, %arg1 : i32, i32
  }
  func.func @transform_2(%arg0: i32, %arg1: i32, %arg2: i32) -> (i32, i32) {
    %c0_i32 = arith.constant 0 : i32
    %c0_i32_0 = arith.constant 0 : i32
    return %c0_i32, %arg1 : i32, i32
  }
  func.func @transform_3(%arg0: i32, %arg1: i32, %arg2: i32) -> (i32, i32) {
    %c0_i32 = arith.constant 0 : i32
    return %arg0, %arg1 : i32, i32
  }
}

</mosaic_0001>

<llo_original>
// kernel: linear_forward.1
$region0: #{linear_forward.1}
  #allocation0 [shape = 'u32[]', space=smem, size = 0x4, offset = 0x4, fixed_abs, tag = 'smem constant byte address 0x4 - core index']
  #allocation1 [shape = 'u32[144,128]{1,0:T(1,128)}', space=vmem, size = 0x12000, scoped, tag = 'internal scratch']
  #allocation2 [shape = 'f32[8,128]{1,0:T(8,128)}', space=vmem, size = 0x1000, scoped, tag = 'scratch operand']
  %s0 = inlined_call_operand.vmem [shape: f32[8,128], index: 0, kind: input, shape index: {}]
  %s1 = inlined_call_operand.hbm [shape: f32[128,128], index: 1, kind: input, shape index: {}]
  %s2 = inlined_call_operand.vmem [shape: f32[1,128], index: 2, kind: input, shape index: {}]
  %s3 = inlined_call_operand.hbm [shape: f32[8,128], index: 3, kind: output, shape index: {}]
  %s4 = sld [smem:[#allocation0]]
  $region34: #{linear_forward.1} parent=0
    _
  %s6 = ssub.s32 1, %s4
  %s7 = scalar_select 0, %s6, %s4
  $region1: #{linear_forward.1} parent=0
    #allocation3 [shape = 'u8[65536]{0}', space=vmem, size = 0x10000, scoped, tag = 'input window, operand 1, single buffered']
    #allocation4 [shape = 's32[1]{0}', space=sflag, size = 0x4, scoped, tag = 'scoped memory for linear_forward.1']
    #allocation5 [shape = 's32[1]{0}', space=sflag, size = 0x4, scoped, tag = 'scoped memory for linear_forward.1']
    #allocation6 [shape = 'u8[4096]{0}', space=vmem, size = 0x1000, scoped, tag = 'output window, operand 0, single buffered']
    %8 = vsyncpa [#allocation4], 0
    %9 = vsyncpa [#allocation5], 0
    // Predicated region
    $region2: #{linear_forward.1} parent=1 // pred_check
      _
    $region3: #{linear_forward.1} parent=1 // pred_check_branch
      %11 = sbr.rel (0) target = $region5
    $region4: #{linear_forward.1} parent=1 // pred_region
      _
    $region5: #{linear_forward.1} parent=1 // pred_fallthru
      _
    // Predicated region
    $region6: #{linear_forward.1} parent=1 // pred_check
      _
    $region7: #{linear_forward.1} parent=1 // pred_check_branch
      %13 = sbr.rel (0) target = $region9
    $region8: #{linear_forward.1} parent=1 // pred_region
      %s15 = ssub.s32 2048, 2048
      %16 = vsyncadd [#allocation4], %s15
      %s17 = sshll.u32 [#allocation3], 4
      %s18 = int_to_ptr.vmem [resolvable:$true] %s17
      %23 = dma.hbm_to_vmem [thread:$0]  %s1, 2048, %s18, [#allocation4], 128, 128, 8
    $region9: #{linear_forward.1} parent=1 // pred_fallthru
      _
    // Predicated region
    $region10: #{linear_forward.1} parent=1 // pred_check
      _
    $region11: #{linear_forward.1} parent=1 // pred_check_branch
      %25 = sbr.rel (0) target = $region13
    $region12: #{linear_forward.1} parent=1 // pred_region
      _
    $region13: #{linear_forward.1} parent=1 // pred_fallthru
      _
    // Predicated region
    $region14: #{linear_forward.1} parent=1 // pred_check
      _
    $region15: #{linear_forward.1} parent=1 // pred_check_branch
      %27 = sbr.rel (0) target = $region17
    $region16: #{linear_forward.1} parent=1 // pred_region
      %28 = dma.done [#allocation4], 2048
    $region17: #{linear_forward.1} parent=1 // pred_fallthru
      _
    %p29 = scmp.eq.s32.totalorder 0, 0
    // Predicated region
    $region18: #{linear_forward.1} parent=1 // pred_check
      %p30 = pneg %p29
    $region19: #{linear_forward.1} parent=1 // pred_check_branch
      %32 = sbr.rel (%p30) target = $region21
    $region20: #{linear_forward.1} parent=1 // pred_region
      %33 = vst [vmem:[#allocation2] sm:$0xff] 0.0
    $region21: #{linear_forward.1} parent=1 // pred_fallthru
      _
    %v34 = vld [vmem:[#allocation2] sm:$0xff]
    %v35 = vld [vmem:[%s0] sm:$0xff]
    %v36 = vld [vmem:[#allocation3] sm:$0xff]
    %v37 = vld [vmem:[#allocation3 + $0x8] sm:$0xff]
    %v38 = vld [vmem:[#allocation3 + $0x10] sm:$0xff]
    %v39 = vld [vmem:[#allocation3 + $0x18] sm:$0xff]
    %v40 = vld [vmem:[#allocation3 + $0x20] sm:$0xff]
    %v41 = vld [vmem:[#allocation3 + $0x28] sm:$0xff]
    %v42 = vld [vmem:[#allocation3 + $0x30] sm:$0xff]
    %v43 = vld [vmem:[#allocation3 + $0x38] sm:$0xff]
    %v44 = vld [vmem:[#allocation3 + $0x40] sm:$0xff]
    %v45 = vld [vmem:[#allocation3 + $0x48] sm:$0xff]
    %v46 = vld [vmem:[#allocation3 + $0x50] sm:$0xff]
    %v47 = vld [vmem:[#allocation3 + $0x58] sm:$0xff]
    %v48 = vld [vmem:[#allocation3 + $0x60] sm:$0xff]
    %v49 = vld [vmem:[#allocation3 + $0x68] sm:$0xff]
    %v50 = vld [vmem:[#allocation3 + $0x70] sm:$0xff]
    %v51 = vld [vmem:[#allocation3 + $0x78] sm:$0xff]
    %52 = vmatprep.subr.mxu0 0.0
    %53 = vmatpush1.msra.mxu0 %v36
    %54 = vmatprep.subr.mxu0 0.0
    %55 = vmatpush1.msra.mxu0 %v37
    %56 = vmatprep.subr.mxu0 0.0
    %57 = vmatpush1.msra.mxu0 %v38
    %58 = vmatprep.subr.mxu0 0.0
    %59 = vmatpush1.msra.mxu0 %v39
    %60 = vmatprep.subr.mxu0 0.0
    %61 = vmatpush1.msra.mxu0 %v40
    %62 = vmatprep.subr.mxu0 0.0
    %63 = vmatpush1.msra.mxu0 %v41
    %64 = vmatprep.subr.mxu0 0.0
    %65 = vmatpush1.msra.mxu0 %v42
    %66 = vmatprep.subr.mxu0 0.0
    %67 = vmatpush1.msra.mxu0 %v43
    %68 = vmatprep.subr.mxu0 0.0
    %69 = vmatpush1.msra.mxu0 %v44
    %70 = vmatprep.subr.mxu0 0.0
    %71 = vmatpush1.msra.mxu0 %v45
    %72 = vmatprep.subr.mxu0 0.0
    %73 = vmatpush1.msra.mxu0 %v46
    %74 = vmatprep.subr.mxu0 0.0
    %75 = vmatpush1.msra.mxu0 %v47
    %76 = vmatprep.subr.mxu0 0.0
    %77 = vmatpush1.msra.mxu0 %v48
    %78 = vmatprep.subr.mxu0 0.0
    %79 = vmatpush1.msra.mxu0 %v49
    %80 = vmatprep.subr.mxu0 0.0
    %81 = vmatpush1.msra.mxu0 %v50
    %82 = vmatprep.subr.mxu0 0.0
    %83 = vmatpush1.msra.mxu0 %v51
    %84 = vmatprep.subr.mxu0 0.0
    %85 = vmatpush1.msra.mxu0 0.0
    %86 = vmatprep.subr.mxu0 0.0
    %87 = vmatpush1.msra.mxu0 0.0
    %88 = vmatprep.subr.mxu0 0.0
    %89 = vmatpush1.msra.mxu0 0.0
    %90 = vmatprep.subr.mxu0 0.0
    %91 = vmatpush1.msra.mxu0 0.0
    %92 = vmatprep.subr.mxu0 0.0
    %93 = vmatpush1.msra.mxu0 0.0
    %94 = vmatprep.subr.mxu0 0.0
    %95 = vmatpush1.msra.mxu0 0.0
    %96 = vmatprep.subr.mxu0 0.0
    %97 = vmatpush1.msra.mxu0 0.0
    %98 = vmatprep.subr.mxu0 0.0
    %99 = vmatpush1.msra.mxu0 0.0
    %100 = vmatprep.subr.mxu0 0.0
    %101 = vmatpush1.msra.mxu0 0.0
    %102 = vmatprep.subr.mxu0 0.0
    %103 = vmatpush1.msra.mxu0 0.0
    %104 = vmatprep.subr.mxu0 0.0
    %105 = vmatpush1.msra.mxu0 0.0
    %106 = vmatprep.subr.mxu0 0.0
    %107 = vmatpush1.msra.mxu0 0.0
    %108 = vmatprep.subr.mxu0 0.0
    %109 = vmatpush1.msra.mxu0 0.0
    %110 = vmatprep.subr.mxu0 0.0
    %111 = vmatpush1.msra.mxu0 0.0
    %112 = vmatprep.subr.mxu0 0.0
    %113 = vmatpush1.msra.mxu0 0.0
    %114 = vmatprep.subr.mxu0 0.0
    %115 = vmatpush1.msra.mxu0 0.0
    %116 = vmatprep.mubr.f32.mxu0 0.0
    %117 = vmatmul.mubr.f32.gmra.mrb[0].mxu0 %v35
    %v118 = vpop.f32.mrb[0].mxu0
    %v119 = vadd.f32 0.0, %v118
    %v120 = vpop.f32.mrb[0].mxu0
    %121 = vdwg.mxu0
    %v122 = vadd.f32 %v34, %v119
    %123 = vst [vmem:[#allocation2] sm:$0xff] %v122
    // Predicated region
    $region22: #{linear_forward.1} parent=1 // pred_check
      %p124 = pneg %p29
    $region23: #{linear_forward.1} parent=1 // pred_check_branch
      %126 = sbr.rel (%p124) target = $region25
    $region24: #{linear_forward.1} parent=1 // pred_region
      %v127 = vld [vmem:[#allocation2] sm:$0xff]
      %v128 = vld [vmem:[%s2] sm:$0x1]
      %v130 = vlaneseq
      %v131 = vshrl.u32 %v130, 7
      %v132 = vsub.s32 0, %v131
      %v133 = vrot.slane %v128, %v132
      %v135 = vadd.f32 %v127, %v133
      %136 = vst [vmem:[#allocation6] sm:$0xff] %v135
    $region25: #{linear_forward.1} parent=1 // pred_fallthru
      _
    // Predicated region
    $region26: #{linear_forward.1} parent=1 // pred_check
      _
    $region27: #{linear_forward.1} parent=1 // pred_check_branch
      %138 = sbr.rel (0) target = $region29
    $region28: #{linear_forward.1} parent=1 // pred_region
      %s140 = ssub.s32 128, 128
      %141 = vsyncadd [#allocation5], %s140
      %s143 = sshll.u32 [#allocation6], 4
      %s144 = int_to_ptr.vmem [resolvable:$true] %s143
      %146 = dma.vmem_to_hbm [thread:$0]  %s144, 128, %s3, [#allocation5]
    $region29: #{linear_forward.1} parent=1 // pred_fallthru
      _
    // Predicated region
    $region30: #{linear_forward.1} parent=1 // pred_check
      _
    $region31: #{linear_forward.1} parent=1 // pred_check_branch
      %148 = sbr.rel (0) target = $region33
    $region32: #{linear_forward.1} parent=1 // pred_region
      %149 = dma.done [#allocation5], 128
    $region33: #{linear_forward.1} parent=1 // pred_fallthru
      _
    %150 = vsyncpa [#allocation4], 1
    %151 = vsyncpa [#allocation5], 1

</llo_original>
